<compile_context>
chip_gen: v5e
topology: v5e:2x2
jax: 0.10.0
libtpu: 0.0.40
codegen_flags: <defaults>
</compile_context>

<pallas_src>
import functools

import jax
import jax.numpy as jnp
from jax.experimental import pallas as pl
from jax.experimental.pallas import tpu as pltpu

BN_EPS = 1e-5
_VMEM_LIMIT_BYTES = 32 * 1024 * 1024


def _stats_kernel(x_ref, w_ref, sum_ref, sq_ref):
    """Pass 1: h = Wcat @ relu(xcat) per tile; accumulate per-channel sum/sumsq.

    x_ref:  (nb, 2*C_in, tm)   raw (pre-relu) fused input block
    w_ref:  (nb, C_out, 2*C_in) block-diagonal weight (broadcast over nb)
    sum/sq: (1, C_out, 1)       output-resident accumulators (per image-block)
    """
    m = pl.program_id(1)

    @pl.when(m == 0)
    def _init():
        sum_ref[...] = jnp.zeros_like(sum_ref)
        sq_ref[...] = jnp.zeros_like(sq_ref)

    xr = jnp.maximum(x_ref[...], 0.0)                              # (nb, K, tm)
    h = jnp.einsum('bok,bkm->bom', w_ref[...], xr,
                   preferred_element_type=jnp.float32)             # (nb, C_out, tm)
    # Lane reduction (XLU) first, then the cheap cross-image add.
    s = jnp.sum(h, axis=2, keepdims=True)                          # (nb, C_out, 1)
    q = jnp.sum(h * h, axis=2, keepdims=True)
    sum_ref[...] += jnp.sum(s, axis=0, keepdims=True)              # (1, C_out, 1)
    sq_ref[...] += jnp.sum(q, axis=0, keepdims=True)


def _apply_kernel(x_ref, w_ref, shift_ref, out_ref):
    """Pass 2: out = (scale * Wcat) @ relu(xcat) + shift, written directly.

    BN scale is pre-folded into w_ref rows; shift_ref is (C_out, 1).
    """
    xr = jnp.maximum(x_ref[...], 0.0)                              # (nb, K, tm)
    h = jnp.einsum('bok,bkm->bom', w_ref[...], xr,
                   preferred_element_type=jnp.float32)             # (nb, C_out, tm)
    out_ref[...] = (h + shift_ref[...]).astype(out_ref.dtype)


def _round_up(a, b):
    return ((a + b - 1) // b) * b


@functools.partial(jax.jit, static_argnames=("tile_lanes",))
def factorized_reduce(x, w1, w2, gamma, beta, *, tile_lanes=65536):
    """x: (N, C_in, H, W) f32 NCHW.  w1/w2: (C_half, C_in).  Returns NCHW f32."""
    N, C_in, H, W = x.shape
    assert H % 2 == 0 and W % 2 == 0, "even spatial dims required"
    C_half = w1.shape[0]
    C_out = 2 * C_half
    K = 2 * C_in
    Ho, Wo = H // 2, W // 2
    hw = Ho * Wo
    M_total = N * hw  # per-channel BN sample count

    # --- glue: stride-2 sub-sampling + channel concat, kept in (N, C, Ho*Wo)
    # layout (no N<->C transposes; output reshape back to NCHW is free). -------
    x1 = x[:, :, 0::2, 0::2].reshape(N, C_in, hw)
    x2 = x[:, :, 1::2, 1::2].reshape(N, C_in, hw)
    xcat = jnp.concatenate([x1, x2], axis=1).astype(jnp.float32)   # (N, K, hw)

    # Block-diagonal fused weight: rows [:C_half] see only x1 channels,
    # rows [C_half:] only x2 channels.
    wcat = jnp.zeros((C_out, K), jnp.float32)
    wcat = wcat.at[:C_half, :C_in].set(w1.astype(jnp.float32))
    wcat = wcat.at[C_half:, C_in:].set(w2.astype(jnp.float32))

    # --- tiling: big lane tiles; block several images per step when hw is
    # small.  tile_lanes=65536 keeps the pass-2 double-buffered working set
    # around 8 MiB (safe on v7x 64 MiB VMEM as well as v5e/v6e 128 MiB). -------
    if hw <= tile_lanes:
        tm, hw_tiles, hw_p = hw, 1, hw         # full-extent lane block (allowed)
        nb = 1
        for d in range(1, N + 1):              # largest divisor of N that fits
            if N % d == 0 and d * hw <= tile_lanes:
                nb = d
    else:
        nb = 1
        hw_tiles = pl.cdiv(hw, tile_lanes)
        tm = _round_up(pl.cdiv(hw, hw_tiles), 128)
        hw_p = tm * hw_tiles
    if hw_p > hw:
        # Zero padding: relu -> 0 -> no contribution to the BN statistics.
        xcat = jnp.pad(xcat, ((0, 0), (0, 0), (0, hw_p - hw)))
    n_blocks = N // nb

    wb = jnp.broadcast_to(wcat[None], (nb, C_out, K))

    # --- pass 1: stats only (h is NOT materialized in HBM) ---------------------
    ssum, ssq = pl.pallas_call(
        _stats_kernel,
        out_shape=(
            jax.ShapeDtypeStruct((n_blocks, C_out, 1), jnp.float32),
            jax.ShapeDtypeStruct((n_blocks, C_out, 1), jnp.float32),
        ),
        grid=(n_blocks, hw_tiles),
        in_specs=[
            pl.BlockSpec((nb, K, tm), lambda n, m: (n, 0, m)),
            pl.BlockSpec((nb, C_out, K), lambda n, m: (0, 0, 0)),
        ],
        out_specs=(
            pl.BlockSpec((1, C_out, 1), lambda n, m: (n, 0, 0)),
            pl.BlockSpec((1, C_out, 1), lambda n, m: (n, 0, 0)),
        ),
        compiler_params=pltpu.CompilerParams(
            dimension_semantics=("parallel", "arbitrary"),
            vmem_limit_bytes=_VMEM_LIMIT_BYTES),
    )(xcat, wb)

    # --- tiny epilogue: reduce per-block partials, build scale/shift, fold the
    # scale into the weight rows (hoisted out of the per-tile loop). ------------
    tot_sum = jnp.sum(ssum, axis=0)[:, 0]                          # (C_out,)
    tot_sq = jnp.sum(ssq, axis=0)[:, 0]
    mean = tot_sum / M_total
    var = jnp.maximum(tot_sq / M_total - mean * mean, 0.0)         # biased variance
    inv_std = jax.lax.rsqrt(var + BN_EPS)
    scale = gamma.astype(jnp.float32) * inv_std                    # (C_out,)
    shift = (beta.astype(jnp.float32) - mean * scale).reshape(C_out, 1)
    w_scaled = jnp.broadcast_to((scale[:, None] * wcat)[None], (nb, C_out, K))
    # TODO(synk): PyTorch training-mode BN also updates running_mean/running_var
    # (with unbiased variance); those buffers are not produced here.

    # --- pass 2: recompute h with folded scale and write normalized output -----
    out_rows = pl.pallas_call(
        _apply_kernel,
        out_shape=jax.ShapeDtypeStruct((N, C_out, hw_p), jnp.float32),
        grid=(n_blocks, hw_tiles),
        in_specs=[
            pl.BlockSpec((nb, K, tm), lambda n, m: (n, 0, m)),
            pl.BlockSpec((nb, C_out, K), lambda n, m: (0, 0, 0)),
            pl.BlockSpec((C_out, 1), lambda n, m: (0, 0)),
        ],
        out_specs=pl.BlockSpec((nb, C_out, tm), lambda n, m: (n, 0, m)),
        compiler_params=pltpu.CompilerParams(
            dimension_semantics=("parallel", "parallel"),
            vmem_limit_bytes=_VMEM_LIMIT_BYTES),
    )(xcat, w_scaled, shift)

    # --- glue: drop lane padding (no-op when hw_p == hw); reshape is free. -----
    out = out_rows[:, :, :hw].reshape(N, C_out, Ho, Wo)
    return out


def _reference(x, w1, w2, gamma, beta):
    """Pure-JAX reference mirroring the PyTorch forward (training-mode BN)."""
    xr = jnp.maximum(x, 0.0)
    x1 = xr[:, :, 0::2, 0::2]
    x2 = xr[:, :, 1::2, 1::2]
    o1 = jnp.einsum('ncij,oc->noij', x1, w1)
    o2 = jnp.einsum('ncij,oc->noij', x2, w2)
    h = jnp.concatenate([o1, o2], axis=1)
    mean = jnp.mean(h, axis=(0, 2, 3), keepdims=True)
    var = jnp.mean((h - mean) ** 2, axis=(0, 2, 3), keepdims=True)
    g = gamma.reshape(1, -1, 1, 1)
    b = beta.reshape(1, -1, 1, 1)
    return (h - mean) / jnp.sqrt(var + BN_EPS) * g + b


if __name__ == "__main__":
    # Module config: C_in=4, C_out=8 (must be even), affine=True.
    N, C_in, H, W = 2, 4, 16, 16
    C_out = 8
    C_half = C_out // 2

    key = jax.random.PRNGKey(0)
    kx, k1, k2 = jax.random.split(key, 3)

    x = jax.random.normal(kx, (N, C_in, H, W), dtype=jnp.float32)
    # Conv2d(C_in, C_half, 1, stride=2, bias=False) weights, squeezed to 2-D.
    w1 = jax.random.normal(k1, (C_half, C_in), dtype=jnp.float32) * 0.5
    w2 = jax.random.normal(k2, (C_half, C_in), dtype=jnp.float32) * 0.5
    # BatchNorm2d affine params at PyTorch defaults.
    gamma = jnp.ones((C_out,), dtype=jnp.float32)
    beta = jnp.zeros((C_out,), dtype=jnp.float32)

    out = factorized_reduce(x, w1, w2, gamma, beta)
    out = jax.block_until_ready(out)

    ref = _reference(x, w1, w2, gamma, beta)
    assert out.shape == (N, C_out, H // 2, W // 2), out.shape
    assert jnp.allclose(out, ref, atol=1e-4, rtol=1e-4), float(
        jnp.max(jnp.abs(out - ref)))

    print("KERNEL_OK")
</pallas_src>

<mosaic_0001>
module attributes {stable_mosaic.version = 11 : i64} {
  func.func @_stats_kernel(%arg0: i32, %arg1: i32, %arg2: memref<2x8x64xf32, #tpu.memory_space<vmem>>, %arg3: memref<2x8x8xf32, #tpu.memory_space<vmem>>, %arg4: memref<1x8x1xf32, #tpu.memory_space<vmem>>, %arg5: memref<1x8x1xf32, #tpu.memory_space<vmem>>) attributes {dimension_semantics = [#tpu.dimension_semantics<parallel>, #tpu.dimension_semantics<arbitrary>], iteration_bounds = array<i64: 1, 1>, scalar_prefetch = 0 : i64, scratch_operands = 0 : i64, tpu.core_type = #tpu.core_type<tc>, window_params = [{transform_indices = @transform_0, window_bounds = array<i64: 2, 8, 64>}, {pipeline_mode = #tpu.pipeline_mode<synchronous>, transform_indices = @transform_1, window_bounds = array<i64: 2, 8, 8>}, {transform_indices = @transform_2, window_bounds = array<i64: 1, 8, 1>}, {transform_indices = @transform_3, window_bounds = array<i64: 1, 8, 1>}]} {
    %c0_i32 = arith.constant 0 : i32
    %0 = arith.cmpi eq, %arg1, %c0_i32 : i32
    %1 = arith.extui %0 : i1 to i32
    %c0_i32_0 = arith.constant 0 : i32
    %2 = arith.cmpi ne, %1, %c0_i32_0 : i32
    scf.if %2 {
      %cst_23 = arith.constant 0.000000e+00 : f32
      %23 = vector.broadcast %cst_23 : f32 to vector<1x8x1xf32>
      %c0_24 = arith.constant 0 : index
      %c0_25 = arith.constant 0 : index
      %c0_26 = arith.constant 0 : index
      %24 = vector.load %arg4[%c0_24, %c0_25, %c0_26] : memref<1x8x1xf32, #tpu.memory_space<vmem>>, vector<1x8x1xf32>
      tpu.vector_store %arg4[%c0_24, %c0_25, %c0_26], %23 {strides = array<i32>} : memref<1x8x1xf32, #tpu.memory_space<vmem>>, vector<1x8x1xf32>,
      %cst_27 = arith.constant 0.000000e+00 : f32
      %25 = vector.broadcast %cst_27 : f32 to vector<1x8x1xf32>
      %c0_28 = arith.constant 0 : index
      %c0_29 = arith.constant 0 : index
      %c0_30 = arith.constant 0 : index
      %26 = vector.load %arg5[%c0_28, %c0_29, %c0_30] : memref<1x8x1xf32, #tpu.memory_space<vmem>>, vector<1x8x1xf32>
      tpu.vector_store %arg5[%c0_28, %c0_29, %c0_30], %25 {strides = array<i32>} : memref<1x8x1xf32, #tpu.memory_space<vmem>>, vector<1x8x1xf32>,
    } else {
    }
    %c0 = arith.constant 0 : index
    %c0_1 = arith.constant 0 : index
    %c0_2 = arith.constant 0 : index
    %3 = vector.load %arg2[%c0, %c0_1, %c0_2] : memref<2x8x64xf32, #tpu.memory_space<vmem>>, vector<2x8x64xf32>
    %cst = arith.constant 0.000000e+00 : f32
    %4 = vector.broadcast %cst : f32 to vector<2x8x64xf32>
    %5 = arith.maximumf %3, %4 : vector<2x8x64xf32>
    %c0_3 = arith.constant 0 : index
    %c0_4 = arith.constant 0 : index
    %c0_5 = arith.constant 0 : index
    %6 = vector.load %arg3[%c0_3, %c0_4, %c0_5] : memref<2x8x8xf32, #tpu.memory_space<vmem>>, vector<2x8x8xf32>
    "tpu.trace_start"() <{level = 10 : i32, message = "bok,bkm->bom"}> : () -> ()
    %cst_6 = arith.constant dense<0.000000e+00> : vector<2x8x64xf32>
    %7 = tpu.matmul %6, %5, %cst_6 {dimension_numbers = #tpu.dot_dimension_numbers<[2], [1], [1], [2], [0, 0, 0, 1, 1, 2], [0], [0]>} : vector<2x8x8xf32>, vector<2x8x64xf32>, vector<2x8x64xf32> -> vector<2x8x64xf32>
    "tpu.trace_stop"() : () -> ()
    %cst_7 = arith.constant dense<0.000000e+00> : vector<2x8xf32>
    %8 = vector.multi_reduction <add>, %7, %cst_7 [2] : vector<2x8x64xf32> to vector<2x8xf32>
    %9 = vector.shape_cast %8 : vector<2x8xf32> to vector<2x8x1xf32>
    %10 = arith.mulf %7, %7 : vector<2x8x64xf32>
    %cst_8 = arith.constant dense<0.000000e+00> : vector<2x8xf32>
    %11 = vector.multi_reduction <add>, %10, %cst_8 [2] : vector<2x8x64xf32> to vector<2x8xf32>
    %12 = vector.shape_cast %11 : vector<2x8xf32> to vector<2x8x1xf32>
    %c0_9 = arith.constant 0 : index
    %c0_10 = arith.constant 0 : index
    %c0_11 = arith.constant 0 : index
    %13 = vector.load %arg4[%c0_9, %c0_10, %c0_11] : memref<1x8x1xf32, #tpu.memory_space<vmem>>, vector<1x8x1xf32>
    %cst_12 = arith.constant dense<0.000000e+00> : vector<8x1xf32>
    %14 = vector.multi_reduction <add>, %9, %cst_12 [0] : vector<2x8x1xf32> to vector<8x1xf32>
    %15 = vector.shape_cast %14 : vector<8x1xf32> to vector<1x8x1xf32>
    %16 = arith.addf %13, %15 : vector<1x8x1xf32>
    %c0_13 = arith.constant 0 : index
    %c0_14 = arith.constant 0 : index
    %c0_15 = arith.constant 0 : index
    %17 = vector.load %arg4[%c0_13, %c0_14, %c0_15] : memref<1x8x1xf32, #tpu.memory_space<vmem>>, vector<1x8x1xf32>
    tpu.vector_store %arg4[%c0_13, %c0_14, %c0_15], %16 {strides = array<i32>} : memref<1x8x1xf32, #tpu.memory_space<vmem>>, vector<1x8x1xf32>,
    %c0_16 = arith.constant 0 : index
    %c0_17 = arith.constant 0 : index
    %c0_18 = arith.constant 0 : index
    %18 = vector.load %arg5[%c0_16, %c0_17, %c0_18] : memref<1x8x1xf32, #tpu.memory_space<vmem>>, vector<1x8x1xf32>
    %cst_19 = arith.constant dense<0.000000e+00> : vector<8x1xf32>
    %19 = vector.multi_reduction <add>, %12, %cst_19 [0] : vector<2x8x1xf32> to vector<8x1xf32>
    %20 = vector.shape_cast %19 : vector<8x1xf32> to vector<1x8x1xf32>
    %21 = arith.addf %18, %20 : vector<1x8x1xf32>
    %c0_20 = arith.constant 0 : index
    %c0_21 = arith.constant 0 : index
    %c0_22 = arith.constant 0 : index
    %22 = vector.load %arg5[%c0_20, %c0_21, %c0_22] : memref<1x8x1xf32, #tpu.memory_space<vmem>>, vector<1x8x1xf32>
    tpu.vector_store %arg5[%c0_20, %c0_21, %c0_22], %21 {strides = array<i32>} : memref<1x8x1xf32, #tpu.memory_space<vmem>>, vector<1x8x1xf32>,
    return
  }
  func.func @transform_0(%arg0: i32, %arg1: i32) -> (i32, i32, i32) {
    %c0_i32 = arith.constant 0 : i32
    %c0_i32_0 = arith.constant 0 : i32
    return %arg0, %c0_i32, %arg1 : i32, i32, i32
  }
  func.func @transform_1(%arg0: i32, %arg1: i32) -> (i32, i32, i32) {
    %c0_i32 = arith.constant 0 : i32
    %c0_i32_0 = arith.constant 0 : i32
    %c0_i32_1 = arith.constant 0 : i32
    %c0_i32_2 = arith.constant 0 : i32
    return %c0_i32, %c0_i32_0, %c0_i32_1 : i32, i32, i32
  }
  func.func @transform_2(%arg0: i32, %arg1: i32) -> (i32, i32, i32) {
    %c0_i32 = arith.constant 0 : i32
    %c0_i32_0 = arith.constant 0 : i32
    %c0_i32_1 = arith.constant 0 : i32
    return %arg0, %c0_i32, %c0_i32_0 : i32, i32, i32
  }
  func.func @transform_3(%arg0: i32, %arg1: i32) -> (i32, i32, i32) {
    %c0_i32 = arith.constant 0 : i32
    %c0_i32_0 = arith.constant 0 : i32
    %c0_i32_1 = arith.constant 0 : i32
    return %arg0, %c0_i32, %c0_i32_0 : i32, i32, i32
  }
}

module attributes {stable_mosaic.version = 11 : i64} {
  func.func @_apply_kernel(%arg0: i32, %arg1: i32, %arg2: memref<2x8x64xf32, #tpu.memory_space<vmem>>, %arg3: memref<2x8x8xf32, #tpu.memory_space<vmem>>, %arg4: memref<8x1xf32, #tpu.memory_space<vmem>>, %arg5: memref<2x8x64xf32, #tpu.memory_space<vmem>>) attributes {dimension_semantics = [#tpu.dimension_semantics<parallel>, #tpu.dimension_semantics<parallel>], iteration_bounds = array<i64: 1, 1>, scalar_prefetch = 0 : i64, scratch_operands = 0 : i64, tpu.core_type = #tpu.core_type<tc>, window_params = [{transform_indices = @transform_0, window_bounds = array<i64: 2, 8, 64>}, {pipeline_mode = #tpu.pipeline_mode<synchronous>, transform_indices = @transform_1, window_bounds = array<i64: 2, 8, 8>}, {pipeline_mode = #tpu.pipeline_mode<synchronous>, transform_indices = @transform_2, window_bounds = array<i64: 8, 1>}, {transform_indices = @transform_3, window_bounds = array<i64: 2, 8, 64>}]} {
    %c0 = arith.constant 0 : index
    %c0_0 = arith.constant 0 : index
    %c0_1 = arith.constant 0 : index
    %0 = vector.load %arg2[%c0, %c0_0, %c0_1] : memref<2x8x64xf32, #tpu.memory_space<vmem>>, vector<2x8x64xf32>
    %cst = arith.constant 0.000000e+00 : f32
    %1 = vector.broadcast %cst : f32 to vector<2x8x64xf32>
    %2 = arith.maximumf %0, %1 : vector<2x8x64xf32>
    %c0_2 = arith.constant 0 : index
    %c0_3 = arith.constant 0 : index
    %c0_4 = arith.constant 0 : index
    %3 = vector.load %arg3[%c0_2, %c0_3, %c0_4] : memref<2x8x8xf32, #tpu.memory_space<vmem>>, vector<2x8x8xf32>
    "tpu.trace_start"() <{level = 10 : i32, message = "bok,bkm->bom"}> : () -> ()
    %cst_5 = arith.constant dense<0.000000e+00> : vector<2x8x64xf32>
    %4 = tpu.matmul %3, %2, %cst_5 {dimension_numbers = #tpu.dot_dimension_numbers<[2], [1], [1], [2], [0, 0, 0, 1, 1, 2], [0], [0]>} : vector<2x8x8xf32>, vector<2x8x64xf32>, vector<2x8x64xf32> -> vector<2x8x64xf32>
    "tpu.trace_stop"() : () -> ()
    %c0_6 = arith.constant 0 : index
    %c0_7 = arith.constant 0 : index
    %5 = vector.load %arg4[%c0_6, %c0_7] : memref<8x1xf32, #tpu.memory_space<vmem>>, vector<8x1xf32>
    %6 = vector.shape_cast %5 : vector<8x1xf32> to vector<1x8x1xf32>
    %7 = vector.broadcast %6 : vector<1x8x1xf32> to vector<2x8x64xf32>
    %8 = arith.addf %4, %7 : vector<2x8x64xf32>
    %c0_8 = arith.constant 0 : index
    %c0_9 = arith.constant 0 : index
    %c0_10 = arith.constant 0 : index
    %9 = vector.load %arg5[%c0_8, %c0_9, %c0_10] : memref<2x8x64xf32, #tpu.memory_space<vmem>>, vector<2x8x64xf32>
    tpu.vector_store %arg5[%c0_8, %c0_9, %c0_10], %8 {strides = array<i32>} : memref<2x8x64xf32, #tpu.memory_space<vmem>>, vector<2x8x64xf32>,
    return
  }
  func.func @transform_0(%arg0: i32, %arg1: i32) -> (i32, i32, i32) {
    %c0_i32 = arith.constant 0 : i32
    %c0_i32_0 = arith.constant 0 : i32
    return %arg0, %c0_i32, %arg1 : i32, i32, i32
  }
  func.func @transform_1(%arg0: i32, %arg1: i32) -> (i32, i32, i32) {
    %c0_i32 = arith.constant 0 : i32
    %c0_i32_0 = arith.constant 0 : i32
    %c0_i32_1 = arith.constant 0 : i32
    %c0_i32_2 = arith.constant 0 : i32
    return %c0_i32, %c0_i32_0, %c0_i32_1 : i32, i32, i32
  }
  func.func @transform_2(%arg0: i32, %arg1: i32) -> (i32, i32) {
    %c0_i32 = arith.constant 0 : i32
    %c0_i32_0 = arith.constant 0 : i32
    %c0_i32_1 = arith.constant 0 : i32
    return %c0_i32, %c0_i32_0 : i32, i32
  }
  func.func @transform_3(%arg0: i32, %arg1: i32) -> (i32, i32, i32) {
    %c0_i32 = arith.constant 0 : i32
    %c0_i32_0 = arith.constant 0 : i32
    return %arg0, %c0_i32, %arg1 : i32, i32, i32
  }
}

</mosaic_0001>

<llo_original>
// kernel: factorized_reduce.3
$region0: #{factorized_reduce.3}
  #allocation0 [shape = 'u32[]', space=smem, size = 0x4, offset = 0x4, fixed_abs, tag = 'smem constant byte address 0x4 - core index']
  #allocation1 [shape = 'u32[72,128]{1,0:T(1,128)}', space=vmem, size = 0x9000, scoped, tag = 'internal scratch']
  %s0 = inlined_call_operand.vmem [shape: f32[2,8,64], index: 0, kind: input, shape index: {}]
  %s1 = inlined_call_operand.vmem [shape: f32[2,8,8], index: 1, kind: input, shape index: {}]
  %s2 = inlined_call_operand.vmem [shape: f32[8,1], index: 2, kind: input, shape index: {}]
  %s3 = inlined_call_operand.vmem [shape: f32[2,8,64], index: 3, kind: output, shape index: {}]
  %s4 = sld [smem:[#allocation0]]
  $region22: #{factorized_reduce.3} parent=0
    _
  %s6 = ssub.s32 1, %s4
  %s7 = scalar_select 0, %s6, %s4
  // Predicated region
  $region2: #{factorized_reduce.3} parent=0 // pred_check
    _
  $region3: #{factorized_reduce.3} parent=0 // pred_check_branch
    %9 = sbr.rel (0) target = $region5
  $region4: #{factorized_reduce.3} parent=0 // pred_region
    _
  $region5: #{factorized_reduce.3} parent=0 // pred_fallthru
    _
  // Predicated region
  $region6: #{factorized_reduce.3} parent=0 // pred_check
    _
  $region7: #{factorized_reduce.3} parent=0 // pred_check_branch
    %11 = sbr.rel (0) target = $region9
  $region8: #{factorized_reduce.3} parent=0 // pred_region
    _
  $region9: #{factorized_reduce.3} parent=0 // pred_fallthru
    _
  // Predicated region
  $region10: #{factorized_reduce.3} parent=0 // pred_check
    _
  $region11: #{factorized_reduce.3} parent=0 // pred_check_branch
    %13 = sbr.rel (0) target = $region13
  $region12: #{factorized_reduce.3} parent=0 // pred_region
    _
  $region13: #{factorized_reduce.3} parent=0 // pred_fallthru
    _
  %v14 = vld [vmem:[%s0] sm:$0xff]
  %v15 = vld [vmem:[%s0 + $0x8] sm:$0xff]
  %v16 = vmax.f32 %v14, 0.0
  %v17 = vmax.f32 %v15, 0.0
  %v18 = vld [vmem:[%s1] sm:$0xff]
  %v19 = vld [vmem:[%s1 + $0x8] sm:$0xff]
  %v20 = vld [vmem:[%s2] sm:$0xff]
  %22 = vset.pattern.permute.xlu0 0
  %23 = vperm.xlu0 %22, %v20
  %v24 = vpop.permute.xlu0 %23
  %vm26 = vcmask 64512
  %v28 = vsel %vm26, %v18, 0
  %30 = vmatpush.msra.mxu0 0.0
  %31 = vmatpush.msra.mxu0 0.0
  %32 = vmatpush.msra.mxu0 0.0
  %33 = vmatpush.msra.mxu0 0.0
  %34 = vmatpush.msra.mxu0 0.0
  %35 = vmatpush.msra.mxu0 0.0
  %36 = vmatpush.msra.mxu0 0.0
  %37 = vmatpush.msra.mxu0 0.0
  %38 = vmatpush.msra.mxu0 0.0
  %39 = vmatpush.msra.mxu0 0.0
  %40 = vmatpush.msra.mxu0 0.0
  %41 = vmatpush.msra.mxu0 0.0
  %42 = vmatpush.msra.mxu0 0.0
  %43 = vmatpush.msra.mxu0 0.0
  %44 = vmatpush.msra.mxu0 0.0
  %45 = vmatpush.msra.mxu0 %v16
  %46 = vmatmul.f32.gmra.mxu0 %v28
  %v47 = vpop.f32.mrf.mxu0
  %v48 = vadd.f32 %v24, %v47
  %49 = vdwg.mxu0
  %v51 = vsel %vm26, %v19, 0
  %53 = vmatpush.msra.mxu0 0.0
  %54 = vmatpush.msra.mxu0 0.0
  %55 = vmatpush.msra.mxu0 0.0
  %56 = vmatpush.msra.mxu0 0.0
  %57 = vmatpush.msra.mxu0 0.0
  %58 = vmatpush.msra.mxu0 0.0
  %59 = vmatpush.msra.mxu0 0.0
  %60 = vmatpush.msra.mxu0 0.0
  %61 = vmatpush.msra.mxu0 0.0
  %62 = vmatpush.msra.mxu0 0.0
  %63 = vmatpush.msra.mxu0 0.0
  %64 = vmatpush.msra.mxu0 0.0
  %65 = vmatpush.msra.mxu0 0.0
  %66 = vmatpush.msra.mxu0 0.0
  %67 = vmatpush.msra.mxu0 0.0
  %68 = vmatpush.msra.mxu0 %v17
  %69 = vmatmul.f32.gmra.mxu0 %v51
  %v70 = vpop.f32.mrf.mxu0
  %v71 = vadd.f32 %v24, %v70
  %72 = vdwg.mxu0
  %vm73 = vcmask 523264
  %74 = vst.msk [vmem:[%s3] sm:$0xff] %vm73, %v48
  %75 = vst.msk [vmem:[%s3 + $0x8] sm:$0xff] %vm73, %v71
  // Predicated region
  $region14: #{factorized_reduce.3} parent=0 // pred_check
    _
  $region15: #{factorized_reduce.3} parent=0 // pred_check_branch
    %77 = sbr.rel (0) target = $region17
  $region16: #{factorized_reduce.3} parent=0 // pred_region
    _
  $region17: #{factorized_reduce.3} parent=0 // pred_fallthru
    _
  // Predicated region
  $region18: #{factorized_reduce.3} parent=0 // pred_check
    _
  $region19: #{factorized_reduce.3} parent=0 // pred_check_branch
    %79 = sbr.rel (0) target = $region21
  $region20: #{factorized_reduce.3} parent=0 // pred_region
    _
  $region21: #{factorized_reduce.3} parent=0 // pred_fallthru
    _

// kernel: factorized_reduce.2
$region0: #{factorized_reduce.2}
  #allocation0 [shape = 'u32[]', space=smem, size = 0x4, offset = 0x4, fixed_abs, tag = 'smem constant byte address 0x4 - core index']
  #allocation1 [shape = 'u32[72,128]{1,0:T(1,128)}', space=vmem, size = 0x9000, scoped, tag = 'internal scratch']
  %s0 = inlined_call_operand.vmem [shape: f32[2,8,64], index: 0, kind: input, shape index: {}]
  %s1 = inlined_call_operand.vmem [shape: f32[2,8,8], index: 1, kind: input, shape index: {}]
  %s2 = inlined_call_operand.vmem [shape: f32[1,8,1], index: 2, kind: output, shape index: {0}]
  %s3 = inlined_call_operand.vmem [shape: f32[1,8,1], index: 3, kind: output, shape index: {1}]
  %4 = xla_tuple %s2, %s3
  %s5 = sld [smem:[#allocation0]]
  $region30: #{factorized_reduce.2} parent=0
    _
  %s7 = ssub.s32 1, %s5
  %s8 = scalar_select 0, %s7, %s5
  // Predicated region
  $region2: #{factorized_reduce.2} parent=0 // pred_check
    _
  $region3: #{factorized_reduce.2} parent=0 // pred_check_branch
    %10 = sbr.rel (0) target = $region5
  $region4: #{factorized_reduce.2} parent=0 // pred_region
    _
  $region5: #{factorized_reduce.2} parent=0 // pred_fallthru
    _
  // Predicated region
  $region6: #{factorized_reduce.2} parent=0 // pred_check
    _
  $region7: #{factorized_reduce.2} parent=0 // pred_check_branch
    %12 = sbr.rel (0) target = $region9
  $region8: #{factorized_reduce.2} parent=0 // pred_region
    _
  $region9: #{factorized_reduce.2} parent=0 // pred_fallthru
    _
  %p13 = scmp.eq.s32.totalorder 0, 0
  // Predicated region
  $region10: #{factorized_reduce.2} parent=0 // pred_check
    %p14 = pneg %p13
  $region11: #{factorized_reduce.2} parent=0 // pred_check_branch
    %16 = sbr.rel (%p14) target = $region13
  $region12: #{factorized_reduce.2} parent=0 // pred_region
    %vm17 = vcmask 7168
    %18 = vst.msk [vmem:[%s2] sm:$0xff] %vm17, 0.0
    %19 = vst.msk [vmem:[%s3] sm:$0xff] %vm17, 0.0
  $region13: #{factorized_reduce.2} parent=0 // pred_fallthru
    _
  %v20 = vld [vmem:[%s0] sm:$0xff]
  %v21 = vld [vmem:[%s0 + $0x8] sm:$0xff]
  %v22 = vmax.f32 %v20, 0.0
  %v23 = vmax.f32 %v21, 0.0
  %v24 = vld [vmem:[%s1] sm:$0xff]
  %v25 = vld [vmem:[%s1 + $0x8] sm:$0xff]
  %vm26 = vcmask 64512
  %v28 = vsel %vm26, %v24, 0
  %30 = vmatpush.msra.mxu0 0.0
  %31 = vmatpush.msra.mxu0 0.0
  %32 = vmatpush.msra.mxu0 0.0
  %33 = vmatpush.msra.mxu0 0.0
  %34 = vmatpush.msra.mxu0 0.0
  %35 = vmatpush.msra.mxu0 0.0
  %36 = vmatpush.msra.mxu0 0.0
  %37 = vmatpush.msra.mxu0 0.0
  %38 = vmatpush.msra.mxu0 0.0
  %39 = vmatpush.msra.mxu0 0.0
  %40 = vmatpush.msra.mxu0 0.0
  %41 = vmatpush.msra.mxu0 0.0
  %42 = vmatpush.msra.mxu0 0.0
  %43 = vmatpush.msra.mxu0 0.0
  %44 = vmatpush.msra.mxu0 0.0
  %45 = vmatpush.msra.mxu0 %v22
  %46 = vmatmul.f32.gmra.mxu0 %v28
  %v47 = vpop.f32.mrf.mxu0
  %v48 = vadd.f32 0.0, %v47
  %49 = vdwg.mxu0
  %v51 = vsel %vm26, %v25, 0
  %53 = vmatpush.msra.mxu0 0.0
  %54 = vmatpush.msra.mxu0 0.0
  %55 = vmatpush.msra.mxu0 0.0
  %56 = vmatpush.msra.mxu0 0.0
  %57 = vmatpush.msra.mxu0 0.0
  %58 = vmatpush.msra.mxu0 0.0
  %59 = vmatpush.msra.mxu0 0.0
  %60 = vmatpush.msra.mxu0 0.0
  %61 = vmatpush.msra.mxu0 0.0
  %62 = vmatpush.msra.mxu0 0.0
  %63 = vmatpush.msra.mxu0 0.0
  %64 = vmatpush.msra.mxu0 0.0
  %65 = vmatpush.msra.mxu0 0.0
  %66 = vmatpush.msra.mxu0 0.0
  %67 = vmatpush.msra.mxu0 0.0
  %68 = vmatpush.msra.mxu0 %v23
  %69 = vmatmul.f32.gmra.mxu0 %v51
  %v70 = vpop.f32.mrf.mxu0
  %v71 = vadd.f32 0.0, %v70
  %72 = vdwg.mxu0
  %vm73 = vcmask 523264
  %v74 = vsel %vm73, %v48, 0.0
  %75 = vadd.xlane.f32.xlu0 %v74
  %v76 = vpop.xlane.xlu0 %75
  %v77 = vsel %vm73, %v71, 0.0
  %78 = vadd.xlane.f32.xlu0 %v77
  %v79 = vpop.xlane.xlu0 %78
  %v80 = vmul.f32 %v48, %v48
  %v81 = vmul.f32 %v71, %v71
  %v82 = vsel %vm73, %v80, 0.0
  %83 = vadd.xlane.f32.xlu0 %v82
  %v84 = vpop.xlane.xlu0 %83
  %v85 = vsel %vm73, %v81, 0.0
  %86 = vadd.xlane.f32.xlu0 %v85
  %v87 = vpop.xlane.xlu0 %86
  %v88 = vld [vmem:[%s2] sm:$0xff]
  %v89 = vadd.f32 %v76, %v79
  %v90 = vadd.f32 %v88, %v89
  %vm91 = vcmask 7168
  %92 = vst.msk [vmem:[%s2] sm:$0xff] %vm91, %v90
  %v93 = vld [vmem:[%s3] sm:$0xff]
  %v94 = vadd.f32 %v84, %v87
  %v95 = vadd.f32 %v93, %v94
  %96 = vst.msk [vmem:[%s3] sm:$0xff] %vm91, %v95
  // Predicated region
  $region14: #{factorized_reduce.2} parent=0 // pred_check
    _
  $region15: #{factorized_reduce.2} parent=0 // pred_check_branch
    %98 = sbr.rel (0) target = $region17
  $region16: #{factorized_reduce.2} parent=0 // pred_region
    _
  $region17: #{factorized_reduce.2} parent=0 // pred_fallthru
    _
  // Predicated region
  $region18: #{factorized_reduce.2} parent=0 // pred_check
    _
  $region19: #{factorized_reduce.2} parent=0 // pred_check_branch
    %100 = sbr.rel (0) target = $region21
  $region20: #{factorized_reduce.2} parent=0 // pred_region
    _
  $region21: #{factorized_reduce.2} parent=0 // pred_fallthru
    _
  // Predicated region
  $region22: #{factorized_reduce.2} parent=0 // pred_check
    _
  $region23: #{factorized_reduce.2} parent=0 // pred_check_branch
    %102 = sbr.rel (0) target = $region25
  $region24: #{factorized_reduce.2} parent=0 // pred_region
    _
  $region25: #{factorized_reduce.2} parent=0 // pred_fallthru
    _
  // Predicated region
  $region26: #{factorized_reduce.2} parent=0 // pred_check
    _
  $region27: #{factorized_reduce.2} parent=0 // pred_check_branch
    %104 = sbr.rel (0) target = $region29
  $region28: #{factorized_reduce.2} parent=0 // pred_region
    _
  $region29: #{factorized_reduce.2} parent=0 // pred_fallthru
    _

</llo_original>
